<compile_context>
chip_gen: v5e
topology: v5e:2x2
jax: 0.10.0
libtpu: 0.0.40
codegen_flags: <defaults>
</compile_context>

<pallas_src>
import functools

import jax
import jax.numpy as jnp
from jax import lax
from jax.experimental import pallas as pl
from jax.experimental.pallas import tpu as pltpu

_LANE = 128            # lane-dense last dim of every block
_SUBLANE = 8
_MAX_TILE_ROWS = 4096  # 4096x128 f32 = 2 MiB per plane per pipeline buffer


def _round_up(x, m):
    return ((x + m - 1) // m) * m


def _cls_pos_kernel(pred_ref, lab_ref, loss_out_ref, pos_out_ref,
                    loss_acc, pos_acc, *,
                    tile_rows, tail_valid_rows, need_row_mask, nsplit, tps):
    b = pl.program_id(1)
    j = pl.program_id(2)

    @pl.when((b == 0) & (j == 0))
    def _init():
        loss_acc[...] = jnp.zeros_like(loss_acc)
        pos_acc[...] = jnp.zeros_like(pos_acc)

    pred = pred_ref[0, 0].astype(jnp.float32)   # pos_pred[:, 0]   (tile_rows, 128)
    l0 = lab_ref[0, 0].astype(jnp.float32)      # pos_label[:, 0]
    l1 = lab_ref[0, 1].astype(jnp.float32)      # pos_label[:, 1]
    l2 = lab_ref[0, 2].astype(jnp.float32)      # pos_label[:, 2]

    def accumulate(pred, l0, l1, l2):
        # nn.BCELoss(reduction='none'): -(y*log(x) + (1-y)*log(1-x)), logs clamped >= -100
        one_m_pred = 1.0 - pred
        log_p = jnp.maximum(jnp.log(pred), -100.0)
        log_1mp = jnp.maximum(jnp.log(one_m_pred), -100.0)
        # -log_loss = log_1mp + l2*(log_p - log_1mp); negation folded into the accumulate.
        neg_log_loss = log_1mp + l2 * (log_p - log_1mp)
        u = 1.0 - l0
        u2 = u * u
        focal = l2 * (one_m_pred * one_m_pred) + (l1 - l2) * (u2 * u2) * (pred * pred)
        loss_term = focal * neg_log_loss
        if tile_rows % _SUBLANE == 0:
            # Sublane-aligned reshape (free) + pure-VPU adds into an (8,128) scratch.
            loss_acc[...] -= jnp.sum(loss_term.reshape(-1, _SUBLANE, _LANE), axis=0)
            pos_acc[...] += jnp.sum(l2.reshape(-1, _SUBLANE, _LANE), axis=0)
        else:
            # Tiny full-extent tile (rows < 8): single cross-sublane reduce.
            loss_acc[0:1, :] -= jnp.sum(loss_term, axis=0, keepdims=True)
            pos_acc[0:1, :] += jnp.sum(l2, axis=0, keepdims=True)

    if need_row_mask:
        # Only the globally-last row tile contains out-of-range rows; keep the
        # mask (iota + compare + 4 selects) off the hot path for every other tile.
        is_tail = (pl.program_id(0) == nsplit - 1) & (j == tps - 1)

        @pl.when(is_tail)
        def _tail():
            row_ids = lax.broadcasted_iota(jnp.int32, (tile_rows, _LANE), 0)
            valid = row_ids < tail_valid_rows
            # Mask before the logs so garbage rows can't produce NaN/Inf.
            accumulate(jnp.where(valid, pred, 0.5),
                       jnp.where(valid, l0, 0.0),
                       jnp.where(valid, l1, 0.0),
                       jnp.where(valid, l2, 0.0))

        @pl.when(jnp.logical_not(is_tail))
        def _body():
            accumulate(pred, l0, l1, l2)
    else:
        accumulate(pred, l0, l1, l2)

    @pl.when((b == pl.num_programs(1) - 1) & (j == pl.num_programs(2) - 1))
    def _fin():
        loss_out_ref[...] = jnp.sum(loss_acc[...], axis=0,
                                    keepdims=True).reshape(1, 1, _LANE)
        pos_out_ref[...] = jnp.sum(pos_acc[...], axis=0,
                                   keepdims=True).reshape(1, 1, _LANE)


def cls_pos_loss(pos_pred, pos_label):
    """pos_pred: (B, C>=1, H, W); pos_label: (B, 3, H, W). Returns scalar f32 loss."""
    B, Cp, H, W = pos_pred.shape
    Bl, Cl, Hl, Wl = pos_label.shape
    assert Bl == B and Hl == H and Wl == W and Cl >= 3 and Cp >= 1

    HW = H * W
    pad = (-HW) % _LANE
    pred3 = pos_pred.reshape(B, Cp, HW)     # contiguous reshape -- no copy
    lab3 = pos_label.reshape(B, Cl, HW)     # contiguous reshape -- no copy
    if pad:
        # TODO(synk): rare path (H*W % 128 != 0); an in-kernel lane mask would avoid
        # this extra HBM round-trip. Pad values chosen so the pad contributes 0.
        pred3 = jnp.pad(pred3, ((0, 0), (0, 0), (0, pad)), constant_values=0.5)
        lab3 = jnp.pad(lab3, ((0, 0), (0, 0), (0, pad)))
    rows = (HW + pad) // _LANE
    pred4 = pred3.reshape(B, Cp, rows, _LANE)   # free reshape
    lab4 = lab3.reshape(B, Cl, rows, _LANE)     # free reshape

    # Load-balanced row tiling; always an even number of row tiles so the leading
    # "parallel" axis splits work evenly across TensorCores on multi-core chips.
    if rows >= 2 * _SUBLANE:
        nsplit = 2
        tps = max(1, -(-rows // (nsplit * _MAX_TILE_ROWS)))   # tiles per split
        n_row_tiles = nsplit * tps
        tile_rows = _round_up(-(-rows // n_row_tiles), _SUBLANE)
    else:
        # TODO(synk): tiny planes (rows < 16); folding B into the row axis (Cp==1)
        # would amortize per-step overhead better, but absolute cost here is ~us.
        nsplit, tps, n_row_tiles = 1, 1, 1
        tile_rows = rows                      # full-extent block (may be < 8)
    tail_valid_rows = rows - (n_row_tiles - 1) * tile_rows
    need_row_mask = tail_valid_rows != tile_rows

    pred_spec = pl.BlockSpec((1, 1, tile_rows, _LANE),
                             lambda s, b, j: (b, 0, s * tps + j, 0))
    lab_spec = pl.BlockSpec((1, 3, tile_rows, _LANE),
                            lambda s, b, j: (b, 0, s * tps + j, 0))
    out_spec = pl.BlockSpec((1, 1, _LANE), lambda s, b, j: (s, 0, 0))

    kernel = functools.partial(
        _cls_pos_kernel, tile_rows=tile_rows, tail_valid_rows=tail_valid_rows,
        need_row_mask=need_row_mask, nsplit=nsplit, tps=tps)

    n_elems = B * HW
    cost = pl.CostEstimate(flops=21 * n_elems,
                           transcendentals=2 * n_elems,
                           bytes_accessed=16 * n_elems)

    loss_vec, pos_vec = pl.pallas_call(
        kernel,
        out_shape=(
            jax.ShapeDtypeStruct((nsplit, 1, _LANE), jnp.float32),
            jax.ShapeDtypeStruct((nsplit, 1, _LANE), jnp.float32),
        ),
        grid_spec=pltpu.PrefetchScalarGridSpec(
            num_scalar_prefetch=0,
            grid=(nsplit, B, tps),
            in_specs=[pred_spec, lab_spec],
            out_specs=[out_spec, out_spec],
            scratch_shapes=[
                pltpu.VMEM((_SUBLANE, _LANE), jnp.float32),
                pltpu.VMEM((_SUBLANE, _LANE), jnp.float32),
            ]),
        compiler_params=pltpu.CompilerParams(
            # TODO(synk): on v7x, pltpu.CORE_PARALLEL on the leading axis would pin
            # the 2-TC split; "parallel" is the portable megacore hint.
            dimension_semantics=("parallel", "arbitrary", "arbitrary"),
            vmem_limit_bytes=40 * 1024 * 1024),
        cost_estimate=cost,
    )(pred4, lab4)

    loss_sum = jnp.sum(loss_vec)
    assigned_box = jnp.sum(pos_vec)
    return 0.01 * loss_sum / jnp.maximum(1.0, assigned_box)


def _reference(pos_pred, pos_label):
    pred = pos_pred[:, 0, :, :]
    l0 = pos_label[:, 0, :, :]
    l1 = pos_label[:, 1, :, :]
    l2 = pos_label[:, 2, :, :]
    log_loss = -(l2 * jnp.maximum(jnp.log(pred), -100.0)
                 + (1.0 - l2) * jnp.maximum(jnp.log(1.0 - pred), -100.0))
    fore = l2 * (1.0 - pred) ** 2
    back = (l1 - l2) * (1.0 - l0) ** 4 * pred ** 2
    focal = fore + back
    assigned = jnp.sum(l2)
    return 0.01 * jnp.sum(focal * log_loss) / jnp.maximum(1.0, assigned)


def _make_inputs(key, B, H, W):
    k1, k2, k3, k4 = jax.random.split(key, 4)
    pos_pred = jax.nn.sigmoid(jax.random.normal(k1, (B, 1, H, W), jnp.float32))
    heat = jax.nn.sigmoid(jax.random.normal(k2, (B, 1, H, W), jnp.float32))
    valid = (jax.random.uniform(k3, (B, 1, H, W)) > 0.2).astype(jnp.float32)
    pos = ((jax.random.uniform(k4, (B, 1, H, W)) > 0.9).astype(jnp.float32)) * valid
    pos_label = jnp.concatenate([heat, valid, pos], axis=1)
    return pos_pred, pos_label


if __name__ == "__main__":
    key = jax.random.PRNGKey(0)
    k_a, k_b, k_c = jax.random.split(key, 3)

    # Case 1: small module-consistent shape (single full-extent row tile).
    pos_pred, pos_label = _make_inputs(k_a, B=2, H=16, W=16)
    loss = jax.jit(cls_pos_loss)(pos_pred, pos_label)
    jax.block_until_ready(loss)
    ref = _reference(pos_pred, pos_label)
    assert jnp.allclose(loss, ref, rtol=1e-4, atol=1e-6), (loss, ref)

    # Case 2: exercises the balanced 2-way split (two 576-row tiles, no mask).
    pos_pred2, pos_label2 = _make_inputs(k_b, B=1, H=384, W=384)
    loss2 = jax.jit(cls_pos_loss)(pos_pred2, pos_label2)
    jax.block_until_ready(loss2)
    ref2 = _reference(pos_pred2, pos_label2)
    assert jnp.allclose(loss2, ref2, rtol=1e-4, atol=1e-6), (loss2, ref2)

    # Case 3: exercises the pl.when-gated partial tail tile (rows=1140 -> 576+564).
    pos_pred3, pos_label3 = _make_inputs(k_c, B=1, H=380, W=384)
    loss3 = jax.jit(cls_pos_loss)(pos_pred3, pos_label3)
    jax.block_until_ready(loss3)
    ref3 = _reference(pos_pred3, pos_label3)
    assert jnp.allclose(loss3, ref3, rtol=1e-4, atol=1e-6), (loss3, ref3)

    print("KERNEL_OK")
</pallas_src>

<mosaic_0001>
module attributes {stable_mosaic.version = 11 : i64} {
  func.func @_cls_pos_kernel(%arg0: i32, %arg1: i32, %arg2: i32, %arg3: memref<1x1x2x128xf32, #tpu.memory_space<vmem>>, %arg4: memref<1x3x2x128xf32, #tpu.memory_space<vmem>>, %arg5: memref<1x1x128xf32, #tpu.memory_space<vmem>>, %arg6: memref<1x1x128xf32, #tpu.memory_space<vmem>>, %arg7: memref<8x128xf32, #tpu.memory_space<vmem>>, %arg8: memref<8x128xf32, #tpu.memory_space<vmem>>) attributes {dimension_semantics = [#tpu.dimension_semantics<parallel>, #tpu.dimension_semantics<arbitrary>, #tpu.dimension_semantics<arbitrary>], iteration_bounds = array<i64: 1, 2, 1>, scalar_prefetch = 0 : i64, scratch_operands = 2 : i64, tpu.core_type = #tpu.core_type<tc>, window_params = [{transform_indices = @transform_0, window_bounds = array<i64: 1, 1, 2, 128>}, {transform_indices = @transform_1, window_bounds = array<i64: 1, 3, 2, 128>}, {transform_indices = @transform_2, window_bounds = array<i64: 1, 1, 128>}, {transform_indices = @transform_3, window_bounds = array<i64: 1, 1, 128>}]} {
    %c0_i32 = arith.constant 0 : i32
    %0 = arith.cmpi eq, %arg1, %c0_i32 : i32
    %c0_i32_0 = arith.constant 0 : i32
    %1 = arith.cmpi eq, %arg2, %c0_i32_0 : i32
    %2 = arith.andi %0, %1 : i1
    %3 = arith.extui %2 : i1 to i32
    %c0_i32_1 = arith.constant 0 : i32
    %4 = arith.cmpi ne, %3, %c0_i32_1 : i32
    scf.if %4 {
      %cst_30 = arith.constant 0.000000e+00 : f32
      %51 = vector.broadcast %cst_30 : f32 to vector<8x128xf32>
      %c0_31 = arith.constant 0 : index
      %c0_32 = arith.constant 0 : index
      %52 = vector.load %arg7[%c0_31, %c0_32] : memref<8x128xf32, #tpu.memory_space<vmem>>, vector<8x128xf32>
      tpu.vector_store %arg7[%c0_31, %c0_32], %51 {strides = array<i32>} : memref<8x128xf32, #tpu.memory_space<vmem>>, vector<8x128xf32>,
      %cst_33 = arith.constant 0.000000e+00 : f32
      %53 = vector.broadcast %cst_33 : f32 to vector<8x128xf32>
      %c0_34 = arith.constant 0 : index
      %c0_35 = arith.constant 0 : index
      %54 = vector.load %arg8[%c0_34, %c0_35] : memref<8x128xf32, #tpu.memory_space<vmem>>, vector<8x128xf32>
      tpu.vector_store %arg8[%c0_34, %c0_35], %53 {strides = array<i32>} : memref<8x128xf32, #tpu.memory_space<vmem>>, vector<8x128xf32>,
    } else {
    }
    %c0 = arith.constant 0 : index
    %c0_2 = arith.constant 0 : index
    %c0_3 = arith.constant 0 : index
    %c0_4 = arith.constant 0 : index
    %5 = vector.load %arg3[%c0, %c0_2, %c0_3, %c0_4] : memref<1x1x2x128xf32, #tpu.memory_space<vmem>>, vector<1x1x2x128xf32>
    %6 = vector.shape_cast %5 : vector<1x1x2x128xf32> to vector<2x128xf32>
    %c0_5 = arith.constant 0 : index
    %c0_6 = arith.constant 0 : index
    %c0_7 = arith.constant 0 : index
    %c0_8 = arith.constant 0 : index
    %7 = vector.load %arg4[%c0_5, %c0_6, %c0_7, %c0_8] : memref<1x3x2x128xf32, #tpu.memory_space<vmem>>, vector<1x1x2x128xf32>
    %8 = vector.shape_cast %7 : vector<1x1x2x128xf32> to vector<2x128xf32>
    %c0_9 = arith.constant 0 : index
    %c1 = arith.constant 1 : index
    %c0_10 = arith.constant 0 : index
    %c0_11 = arith.constant 0 : index
    %9 = vector.load %arg4[%c0_9, %c1, %c0_10, %c0_11] : memref<1x3x2x128xf32, #tpu.memory_space<vmem>>, vector<1x1x2x128xf32>
    %10 = vector.shape_cast %9 : vector<1x1x2x128xf32> to vector<2x128xf32>
    %c0_12 = arith.constant 0 : index
    %c2 = arith.constant 2 : index
    %c0_13 = arith.constant 0 : index
    %c0_14 = arith.constant 0 : index
    %11 = vector.load %arg4[%c0_12, %c2, %c0_13, %c0_14] : memref<1x3x2x128xf32, #tpu.memory_space<vmem>>, vector<1x1x2x128xf32>
    %12 = vector.shape_cast %11 : vector<1x1x2x128xf32> to vector<2x128xf32>
    %cst = arith.constant 1.000000e+00 : f32
    %13 = vector.broadcast %cst : f32 to vector<2x128xf32>
    %14 = arith.subf %13, %6 : vector<2x128xf32>
    %15 = math.log %6 : vector<2x128xf32>
    %cst_15 = arith.constant -1.000000e+02 : f32
    %16 = vector.broadcast %cst_15 : f32 to vector<2x128xf32>
    %17 = arith.maximumf %15, %16 : vector<2x128xf32>
    %18 = math.log %14 : vector<2x128xf32>
    %cst_16 = arith.constant -1.000000e+02 : f32
    %19 = vector.broadcast %cst_16 : f32 to vector<2x128xf32>
    %20 = arith.maximumf %18, %19 : vector<2x128xf32>
    %21 = arith.subf %17, %20 : vector<2x128xf32>
    %22 = arith.mulf %12, %21 : vector<2x128xf32>
    %23 = arith.addf %20, %22 : vector<2x128xf32>
    %cst_17 = arith.constant 1.000000e+00 : f32
    %24 = vector.broadcast %cst_17 : f32 to vector<2x128xf32>
    %25 = arith.subf %24, %8 : vector<2x128xf32>
    %26 = arith.mulf %25, %25 : vector<2x128xf32>
    %27 = arith.mulf %14, %14 : vector<2x128xf32>
    %28 = arith.mulf %12, %27 : vector<2x128xf32>
    %29 = arith.subf %10, %12 : vector<2x128xf32>
    %30 = arith.mulf %26, %26 : vector<2x128xf32>
    %31 = arith.mulf %29, %30 : vector<2x128xf32>
    %32 = arith.mulf %6, %6 : vector<2x128xf32>
    %33 = arith.mulf %31, %32 : vector<2x128xf32>
    %34 = arith.addf %28, %33 : vector<2x128xf32>
    %35 = arith.mulf %34, %23 : vector<2x128xf32>
    %c0_18 = arith.constant 0 : index
    %c0_19 = arith.constant 0 : index
    %36 = vector.load %arg7[%c0_18, %c0_19] : memref<8x128xf32, #tpu.memory_space<vmem>>, vector<1x128xf32>
    %cst_20 = arith.constant dense<0.000000e+00> : vector<128xf32>
    %37 = vector.multi_reduction <add>, %35, %cst_20 [0] : vector<2x128xf32> to vector<128xf32>
    %38 = vector.shape_cast %37 : vector<128xf32> to vector<1x128xf32>
    %39 = arith.subf %36, %38 : vector<1x128xf32>
    %c0_21 = arith.constant 0 : index
    %c0_22 = arith.constant 0 : index
    %40 = vector.load %arg7[%c0_21, %c0_22] : memref<8x128xf32, #tpu.memory_space<vmem>>, vector<1x128xf32>
    tpu.vector_store %arg7[%c0_21, %c0_22], %39 {strides = array<i32>} : memref<8x128xf32, #tpu.memory_space<vmem>>, vector<1x128xf32>,
    %c0_23 = arith.constant 0 : index
    %c0_24 = arith.constant 0 : index
    %41 = vector.load %arg8[%c0_23, %c0_24] : memref<8x128xf32, #tpu.memory_space<vmem>>, vector<1x128xf32>
    %cst_25 = arith.constant dense<0.000000e+00> : vector<128xf32>
    %42 = vector.multi_reduction <add>, %12, %cst_25 [0] : vector<2x128xf32> to vector<128xf32>
    %43 = vector.shape_cast %42 : vector<128xf32> to vector<1x128xf32>
    %44 = arith.addf %41, %43 : vector<1x128xf32>
    %c0_26 = arith.constant 0 : index
    %c0_27 = arith.constant 0 : index
    %45 = vector.load %arg8[%c0_26, %c0_27] : memref<8x128xf32, #tpu.memory_space<vmem>>, vector<1x128xf32>
    tpu.vector_store %arg8[%c0_26, %c0_27], %44 {strides = array<i32>} : memref<8x128xf32, #tpu.memory_space<vmem>>, vector<1x128xf32>,
    %c1_i32 = arith.constant 1 : i32
    %46 = arith.cmpi eq, %arg1, %c1_i32 : i32
    %c0_i32_28 = arith.constant 0 : i32
    %47 = arith.cmpi eq, %arg2, %c0_i32_28 : i32
    %48 = arith.andi %46, %47 : i1
    %49 = arith.extui %48 : i1 to i32
    %c0_i32_29 = arith.constant 0 : i32
    %50 = arith.cmpi ne, %49, %c0_i32_29 : i32
    scf.if %50 {
      %c0_30 = arith.constant 0 : index
      %c0_31 = arith.constant 0 : index
      %51 = vector.load %arg7[%c0_30, %c0_31] : memref<8x128xf32, #tpu.memory_space<vmem>>, vector<8x128xf32>
      %cst_32 = arith.constant dense<0.000000e+00> : vector<128xf32>
      %52 = vector.multi_reduction <add>, %51, %cst_32 [0] : vector<8x128xf32> to vector<128xf32>
      %53 = vector.shape_cast %52 : vector<128xf32> to vector<1x128xf32>
      %54 = vector.shape_cast %53 : vector<1x128xf32> to vector<1x1x128xf32>
      %c0_33 = arith.constant 0 : index
      %c0_34 = arith.constant 0 : index
      %c0_35 = arith.constant 0 : index
      %55 = vector.load %arg5[%c0_33, %c0_34, %c0_35] : memref<1x1x128xf32, #tpu.memory_space<vmem>>, vector<1x1x128xf32>
      tpu.vector_store %arg5[%c0_33, %c0_34, %c0_35], %54 {strides = array<i32>} : memref<1x1x128xf32, #tpu.memory_space<vmem>>, vector<1x1x128xf32>,
      %c0_36 = arith.constant 0 : index
      %c0_37 = arith.constant 0 : index
      %56 = vector.load %arg8[%c0_36, %c0_37] : memref<8x128xf32, #tpu.memory_space<vmem>>, vector<8x128xf32>
      %cst_38 = arith.constant dense<0.000000e+00> : vector<128xf32>
      %57 = vector.multi_reduction <add>, %56, %cst_38 [0] : vector<8x128xf32> to vector<128xf32>
      %58 = vector.shape_cast %57 : vector<128xf32> to vector<1x128xf32>
      %59 = vector.shape_cast %58 : vector<1x128xf32> to vector<1x1x128xf32>
      %c0_39 = arith.constant 0 : index
      %c0_40 = arith.constant 0 : index
      %c0_41 = arith.constant 0 : index
      %60 = vector.load %arg6[%c0_39, %c0_40, %c0_41] : memref<1x1x128xf32, #tpu.memory_space<vmem>>, vector<1x1x128xf32>
      tpu.vector_store %arg6[%c0_39, %c0_40, %c0_41], %59 {strides = array<i32>} : memref<1x1x128xf32, #tpu.memory_space<vmem>>, vector<1x1x128xf32>,
    } else {
    }
    return
  }
  func.func @transform_0(%arg0: i32, %arg1: i32, %arg2: i32) -> (i32, i32, i32, i32) {
    %c1_i32 = arith.constant 1 : i32
    %0 = arith.muli %arg0, %c1_i32 : i32
    %1 = arith.addi %0, %arg2 : i32
    %c0_i32 = arith.constant 0 : i32
    %c0_i32_0 = arith.constant 0 : i32
    %c0_i32_1 = arith.constant 0 : i32
    return %arg1, %c0_i32, %1, %c0_i32_0 : i32, i32, i32, i32
  }
  func.func @transform_1(%arg0: i32, %arg1: i32, %arg2: i32) -> (i32, i32, i32, i32) {
    %c1_i32 = arith.constant 1 : i32
    %0 = arith.muli %arg0, %c1_i32 : i32
    %1 = arith.addi %0, %arg2 : i32
    %c0_i32 = arith.constant 0 : i32
    %c0_i32_0 = arith.constant 0 : i32
    %c0_i32_1 = arith.constant 0 : i32
    return %arg1, %c0_i32, %1, %c0_i32_0 : i32, i32, i32, i32
  }
  func.func @transform_2(%arg0: i32, %arg1: i32, %arg2: i32) -> (i32, i32, i32) {
    %c0_i32 = arith.constant 0 : i32
    %c0_i32_0 = arith.constant 0 : i32
    %c0_i32_1 = arith.constant 0 : i32
    return %arg0, %c0_i32, %c0_i32_0 : i32, i32, i32
  }
  func.func @transform_3(%arg0: i32, %arg1: i32, %arg2: i32) -> (i32, i32, i32) {
    %c0_i32 = arith.constant 0 : i32
    %c0_i32_0 = arith.constant 0 : i32
    %c0_i32_1 = arith.constant 0 : i32
    return %arg0, %c0_i32, %c0_i32_0 : i32, i32, i32
  }
}

</mosaic_0001>

<llo_original>
// kernel: cls_pos_loss.1
$region0: #{cls_pos_loss.1}
  #allocation0 [shape = 'u32[]', space=smem, size = 0x4, offset = 0x4, fixed_abs, tag = 'smem constant byte address 0x4 - core index']
  #allocation1 [shape = 'u32[72,128]{1,0:T(1,128)}', space=vmem, size = 0x9000, scoped, tag = 'internal scratch']
  #allocation2 [shape = 'f32[8,128]{1,0:T(8,128)}', space=vmem, size = 0x1000, scoped, tag = 'scratch operand']
  #allocation3 [shape = 'f32[8,128]{1,0:T(8,128)}', space=vmem, size = 0x1000, scoped, tag = 'scratch operand']
  %s0 = inlined_call_operand.vmem [shape: f32[2,1,2,128], index: 0, kind: input, shape index: {}]
  %s1 = inlined_call_operand.vmem [shape: f32[2,3,2,128], index: 1, kind: input, shape index: {}]
  %s2 = inlined_call_operand.vmem [shape: f32[1,1,128], index: 2, kind: output, shape index: {0}]
  %s3 = inlined_call_operand.vmem [shape: f32[1,1,128], index: 3, kind: output, shape index: {1}]
  %4 = xla_tuple %s2, %s3
  %s5 = sld [smem:[#allocation0]]
  $region57: #{cls_pos_loss.1} parent=0
    _
  %s7 = ssub.s32 1, %s5
  %s8 = scalar_select 0, %s7, %s5
  loop: start=0, step=1, limit=4
  $region2: #{cls_pos_loss.1} parent=0 // loop_pre_header
    _
  $region3: #{cls_pos_loss.1} parent=0 // loop_header
    %s10 = sphi 0, %s14
    %p11 = scmp.ge.s32.totalorder %s10, 4
    %s17 = sphi 0, %s36
    %s18 = sphi 0, %s32
    %s19 = sphi 0, %s28
    %s20 = sphi 0, %s17
    %s21 = sphi 0, %s18
    %s22 = sphi 0, %s19
    %s23 = sphi 0, %s20
    %s24 = sphi 0, %s21
    %s25 = sphi 0, %s22
    %s43 = sphi 0, %s45
    %s46 = sphi 0, %s43
    %s47 = sphi 0, %s46
    %s63 = sphi 0, %s47
    %s73 = sphi 0, %s75
    %s76 = sphi 0, %s73
    %s77 = sphi 0, %s76
    %s93 = sphi 0, %s77
    %s99 = sphi 0, %s101
    %s102 = sphi 0, %s99
    %s103 = sphi 0, %s102
    %s119 = sphi 0, %s103
    %s125 = sphi 0, %s127
    %s128 = sphi 0, %s125
    %s129 = sphi 0, %s128
    %s145 = sphi 0, %s129
  $region4: #{cls_pos_loss.1} parent=0 // loop_header_branch
    %13 = sbr.rel (%p11) target = $region8
  $region5: #{cls_pos_loss.1} parent=0 // loop_body
    %s15 = ssub.s32 %s10, 1
    %s16 = ssub.s32 %s10, 2
    %s26 = sadd.s32 1, %s19
    %p27 = scmp.ge.s32.totalorder %s26, 1
    %s28 = scalar_select %p27, 0, %s26
    %s29 = sadd.s32 1, %s18
    %s30 = scalar_select %p27, %s29, %s18
    %p31 = scmp.ge.s32.totalorder %s30, 2
    %s32 = scalar_select %p31, 0, %s30
    %s33 = sadd.s32 1, %s17
    %s34 = scalar_select %p31, %s33, %s17
    %p35 = scmp.ge.s32.totalorder %s34, 1
    %s36 = scalar_select %p35, 0, %s34
    %s37 = sadd.s32 %s17, %s19
    %s38 = sadd.s32 %s36, %s28
    %s39 = ssub.s32 %s18, %s32
    %s40 = ssub.s32 %s37, %s38
    %s41 = sor.u32 %s39, %s40
    %p42 = scmp.eq.s32.totalorder %s41, 0
    %s44 = sadd.s32 %s43, 1
    %s45 = scalar_select %p42, %s43, %s44
    %p48 = pneg %p42
    %p49 = scmp.eq.s32.totalorder %s10, 1
    %p50 = por %p48, %p49
    %p51 = scmp.ne.s32.totalorder %s43, %s46
    %p52 = scmp.eq.s32.totalorder %s10, 0
    %p53 = por %p51, %p52
    %p54 = scmp.ne.s32.totalorder %s43, %s46
    %p55 = scmp.eq.s32.totalorder %s15, 1
    %p56 = por %p54, %p55
    %p57 = scmp.ne.s32.totalorder %s46, %s47
    %p58 = scmp.eq.s32.totalorder %s15, 0
    %p59 = por %p57, %p58
    %p60 = scmp.ne.s32.totalorder %s46, %s47
    %p61 = scmp.eq.s32.totalorder %s16, 1
    %p62 = por %p60, %p61
    %p64 = scmp.ne.s32.totalorder %s47, %s63
    %p65 = scmp.eq.s32.totalorder %s16, 0
    %p66 = por %p64, %p65
    %s67 = sadd.s32 %s17, %s19
    %s68 = sadd.s32 %s36, %s28
    %s69 = ssub.s32 %s18, %s32
    %s70 = ssub.s32 %s67, %s68
    %s71 = sor.u32 %s69, %s70
    %p72 = scmp.eq.s32.totalorder %s71, 0
    %s74 = sadd.s32 %s73, 1
    %s75 = scalar_select %p72, %s73, %s74
    %p78 = pneg %p72
    %p79 = scmp.eq.s32.totalorder %s10, 1
    %p80 = por %p78, %p79
    %p81 = scmp.ne.s32.totalorder %s73, %s76
    %p82 = scmp.eq.s32.totalorder %s10, 0
    %p83 = por %p81, %p82
    %p84 = scmp.ne.s32.totalorder %s73, %s76
    %p85 = scmp.eq.s32.totalorder %s15, 1
    %p86 = por %p84, %p85
    %p87 = scmp.ne.s32.totalorder %s76, %s77
    %p88 = scmp.eq.s32.totalorder %s15, 0
    %p89 = por %p87, %p88
    %p90 = scmp.ne.s32.totalorder %s76, %s77
    %p91 = scmp.eq.s32.totalorder %s16, 1
    %p92 = por %p90, %p91
    %p94 = scmp.ne.s32.totalorder %s77, %s93
    %p95 = scmp.eq.s32.totalorder %s16, 0
    %p96 = por %p94, %p95
    %s97 = ssub.s32 %s17, %s36
    %p98 = scmp.eq.s32.totalorder %s97, 0
    %s100 = sadd.s32 %s99, 1
    %s101 = scalar_select %p98, %s99, %s100
    %p104 = pneg %p98
    %p105 = scmp.eq.s32.totalorder %s10, 1
    %p106 = por %p104, %p105
    %p107 = scmp.ne.s32.totalorder %s99, %s102
    %p108 = scmp.eq.s32.totalorder %s10, 0
    %p109 = por %p107, %p108
    %p110 = scmp.ne.s32.totalorder %s99, %s102
    %p111 = scmp.eq.s32.totalorder %s15, 1
    %p112 = por %p110, %p111
    %p113 = scmp.ne.s32.totalorder %s102, %s103
    %p114 = scmp.eq.s32.totalorder %s15, 0
    %p115 = por %p113, %p114
    %p116 = scmp.ne.s32.totalorder %s102, %s103
    %p117 = scmp.eq.s32.totalorder %s16, 1
    %p118 = por %p116, %p117
    %p120 = scmp.ne.s32.totalorder %s103, %s119
    %p121 = scmp.eq.s32.totalorder %s16, 0
    %p122 = por %p120, %p121
    %s123 = ssub.s32 %s17, %s36
    %p124 = scmp.eq.s32.totalorder %s123, 0
    %s126 = sadd.s32 %s125, 1
    %s127 = scalar_select %p124, %s125, %s126
    %p130 = pneg %p124
    %p131 = scmp.eq.s32.totalorder %s10, 1
    %p132 = por %p130, %p131
    %p133 = scmp.ne.s32.totalorder %s125, %s128
    %p134 = scmp.eq.s32.totalorder %s10, 0
    %p135 = por %p133, %p134
    %p136 = scmp.ne.s32.totalorder %s125, %s128
    %p137 = scmp.eq.s32.totalorder %s15, 1
    %p138 = por %p136, %p137
    %p139 = scmp.ne.s32.totalorder %s128, %s129
    %p140 = scmp.eq.s32.totalorder %s15, 0
    %p141 = por %p139, %p140
    %p142 = scmp.ne.s32.totalorder %s128, %s129
    %p143 = scmp.eq.s32.totalorder %s16, 1
    %p144 = por %p142, %p143
    %p146 = scmp.ne.s32.totalorder %s129, %s145
    %p147 = scmp.eq.s32.totalorder %s16, 0
    %p148 = por %p146, %p147
    %p149 = scmp.le.s32.totalorder 1, %s10
    %p150 = scmp.lt.s32.totalorder %s10, 3
    %p151 = pnand %p149, %p150
    %p152 = pneg %p151
    // Predicated region
    $region9: #{cls_pos_loss.1} parent=5 // pred_check
      _
    $region10: #{cls_pos_loss.1} parent=5 // pred_check_branch
      %154 = sbr.rel (%p151) target = $region12
    $region11: #{cls_pos_loss.1} parent=5 // pred_region
      %s155 = ssub.s32 %s10, 1
    $region12: #{cls_pos_loss.1} parent=5 // pred_fallthru
      _
    %p156 = scmp.lt.s32.totalorder %s10, 2
    // Predicated region
    $region13: #{cls_pos_loss.1} parent=5 // pred_check
      %p157 = pneg %p156
    $region14: #{cls_pos_loss.1} parent=5 // pred_check_branch
      %159 = sbr.rel (%p157) target = $region16
    $region15: #{cls_pos_loss.1} parent=5 // pred_region
      // Predicated region
      $region17: #{cls_pos_loss.1} parent=15 // pred_check
        %p160 = pneg %p53
      $region18: #{cls_pos_loss.1} parent=15 // pred_check_branch
        %162 = sbr.rel (%p160) target = $region20
      $region19: #{cls_pos_loss.1} parent=15 // pred_region
        %s163 = sadd.s32 %s17, %s19
        %p164 = scmp.lt.s32.totalorder %s18, 1
        %s165 = scalar_select %p164, %s18, 1
        %p166 = scmp.lt.s32.totalorder %s163, 0
        %s167 = scalar_select %p166, %s163, 0
        %s168 = sadd.s32 %s167, %s165
        %s169 = smul.addr %s168, 2
        %s170 = scalar_lea.vmem %s0, %s169
        %s171 = sadd.s32 %s17, %s19
      $region20: #{cls_pos_loss.1} parent=15 // pred_fallthru
        _
      // Predicated region
      $region21: #{cls_pos_loss.1} parent=15 // pred_check
        %p172 = pneg %p83
      $region22: #{cls_pos_loss.1} parent=15 // pred_check_branch
        %174 = sbr.rel (%p172) target = $region24
      $region23: #{cls_pos_loss.1} parent=15 // pred_region
        %s175 = sadd.s32 %s17, %s19
        %p176 = scmp.lt.s32.totalorder %s18, 1
        %s177 = scalar_select %p176, %s18, 1
        %p178 = scmp.lt.s32.totalorder %s175, 0
        %s179 = scalar_select %p178, %s175, 0
        %s180 = smul.addr %s177, 3
        %s181 = sadd.s32 %s179, %s180
        %s182 = smul.addr %s181, 2
        %s183 = scalar_lea.vmem %s1, %s182
        %s184 = sadd.s32 %s17, %s19
      $region24: #{cls_pos_loss.1} parent=15 // pred_fallthru
        _
    $region16: #{cls_pos_loss.1} parent=5 // pred_fallthru
      _
    %p185 = scmp.le.s32.totalorder 1, %s10
    %p186 = scmp.lt.s32.totalorder %s10, 3
    %p187 = pnand %p185, %p186
    %p188 = pneg %p187
    // Predicated region
    $region25: #{cls_pos_loss.1} parent=5 // pred_check
      _
    $region26: #{cls_pos_loss.1} parent=5 // pred_check_branch
      %190 = sbr.rel (%p187) target = $region28
    $region27: #{cls_pos_loss.1} parent=5 // pred_region
      %s191 = ssub.s32 %s10, 1
      %s192 = sadd.s32 %s20, %s22
      %p193 = scmp.lt.s32.totalorder %s21, 1
      %s194 = scalar_select %p193, %s21, 1
      %p195 = scmp.lt.s32.totalorder %s192, 0
      %s196 = scalar_select %p195, %s192, 0
      %s197 = sadd.s32 %s196, %s194
      %s198 = smul.addr %s197, 2
      %s199 = scalar_lea.vmem %s0, %s198
      %p200 = pneg %p59
      %p201 = pneg %p56
      %s202 = sadd.s32 %s20, %s22
      %p203 = scmp.lt.s32.totalorder %s21, 1
      %s204 = scalar_select %p203, %s21, 1
      %p205 = scmp.lt.s32.totalorder %s202, 0
      %s206 = scalar_select %p205, %s202, 0
      %s207 = smul.addr %s204, 3
      %s208 = sadd.s32 %s206, %s207
      %s209 = smul.addr %s208, 2
      %s210 = scalar_lea.vmem %s1, %s209
      %p211 = pneg %p89
      %p212 = pneg %p86
      %p213 = pneg %p115
      %p214 = pneg %p112
      %p215 = scmp.lt.s32.totalorder %s20, 0
      %s216 = scalar_select %p215, %s20, 0
      %s217 = scalar_lea.vmem %s2, %s216
      %p218 = pneg %p141
      %p219 = pneg %p138
      %p220 = scmp.lt.s32.totalorder %s20, 0
      %s221 = scalar_select %p220, %s20, 0
      %s222 = scalar_lea.vmem %s3, %s221
      %s223 = sadd.s32 %s20, %s22
      %p224 = scmp.lt.s32.totalorder %s21, 1
      %s225 = scalar_select %p224, %s21, 1
      %p226 = scmp.lt.s32.totalorder %s223, 0
      %s227 = scalar_select %p226, %s223, 0
      %s228 = sadd.s32 %s227, %s225
      %s229 = smul.addr %s228, 2
      %s230 = scalar_lea.vmem %s0, %s229
      %s231 = sadd.s32 %s20, %s22
      %s232 = sadd.s32 %s20, %s22
      %p233 = scmp.lt.s32.totalorder %s21, 1
      %s234 = scalar_select %p233, %s21, 1
      %p235 = scmp.lt.s32.totalorder %s232, 0
      %s236 = scalar_select %p235, %s232, 0
      %s237 = smul.addr %s234, 3
      %s238 = sadd.s32 %s236, %s237
      %s239 = smul.addr %s238, 2
      %s240 = scalar_lea.vmem %s1, %s239
      %s241 = sadd.s32 %s20, %s22
      %p242 = scmp.lt.s32.totalorder %s20, 0
      %s243 = scalar_select %p242, %s20, 0
      %s244 = scalar_lea.vmem %s2, %s243
      %p245 = scmp.lt.s32.totalorder %s20, 0
      %s246 = scalar_select %p245, %s20, 0
      %s247 = scalar_lea.vmem %s3, %s246
      %p248 = scmp.eq.s32.totalorder %s21, 0
      %p249 = scmp.eq.s32.totalorder %s22, 0
      %p250 = pnand %p248, %p249
      %p251 = pneg %p250
      // Predicated region
      $region29: #{cls_pos_loss.1} parent=27 // pred_check
        _
      $region30: #{cls_pos_loss.1} parent=27 // pred_check_branch
        %253 = sbr.rel (%p250) target = $region32
      $region31: #{cls_pos_loss.1} parent=27 // pred_region
        %254 = vst [vmem:[#allocation2] sm:$0xff] 0.0
        %255 = vst [vmem:[#allocation3] sm:$0xff] 0.0
      $region32: #{cls_pos_loss.1} parent=27 // pred_fallthru
        _
      %v256 = vld [vmem:[%s230] sm:$0x3]
      %v257 = vld [vmem:[%s240] sm:$0x3]
      %s258 = scalar_lea.vmem %s240, 2
      %v259 = vld [vmem:[%s258] sm:$0x3]
      %s260 = scalar_lea.vmem %s240, 4
      %v261 = vld [vmem:[%s260] sm:$0x3]
      %v262 = vsub.f32 1.0, %v256
      %v263 = vlog2.pop %v256
      %v264 = vmul.f32 %v263, 0.6931472
      %v265 = vmax.f32 %v264, -100.0
      %v266 = vlog2.pop %v262
      %v267 = vmul.f32 %v266, 0.6931472
      %v268 = vmax.f32 %v267, -100.0
      %v269 = vsub.f32 %v265, %v268
      %v270 = vmul.f32 %v261, %v269
      %v271 = vadd.f32 %v268, %v270
      %v272 = vsub.f32 1.0, %v257
      %v273 = vmul.f32 %v272, %v272
      %v274 = vmul.f32 %v262, %v262
      %v275 = vmul.f32 %v261, %v274
      %v276 = vsub.f32 %v259, %v261
      %v277 = vmul.f32 %v273, %v273
      %v278 = vmul.f32 %v276, %v277
      %v279 = vmul.f32 %v256, %v256
      %v280 = vmul.f32 %v278, %v279
      %v281 = vadd.f32 %v275, %v280
      %v282 = vmul.f32 %v281, %v271
      %v283 = vld [vmem:[#allocation2] sm:$0x1]
      %vm284 = vcmask 1041408
      %v285 = vsel %vm284, %v282, 0.0
      %v286 = vrot.slane %v285, 4
      %v287 = vadd.f32 %v285, %v286
      %v288 = vrot.slane %v287, 2
      %v289 = vadd.f32 %v287, %v288
      %v290 = vrot.slane %v289, 1
      %v291 = vadd.f32 %v289, %v290
      %v292 = vsub.f32 %v283, %v291
      %293 = vst [vmem:[#allocation2] sm:$0x1] %v292
      %v294 = vld [vmem:[#allocation3] sm:$0x1]
      %v295 = vsel %vm284, %v261, 0.0
      %v296 = vrot.slane %v295, 4
      %v297 = vadd.f32 %v295, %v296
      %v298 = vrot.slane %v297, 2
      %v299 = vadd.f32 %v297, %v298
      %v300 = vrot.slane %v299, 1
      %v301 = vadd.f32 %v299, %v300
      %v302 = vadd.f32 %v294, %v301
      %303 = vst [vmem:[#allocation3] sm:$0x1] %v302
      %p304 = scmp.eq.s32.totalorder %s21, 1
      %p305 = pnand %p304, %p249
      %p306 = pneg %p305
      // Predicated region
      $region33: #{cls_pos_loss.1} parent=27 // pred_check
        _
      $region34: #{cls_pos_loss.1} parent=27 // pred_check_branch
        %308 = sbr.rel (%p305) target = $region36
      $region35: #{cls_pos_loss.1} parent=27 // pred_region
        %v309 = vld [vmem:[#allocation2] sm:$0xff]
        %v310 = vrot.slane %v309, 4
        %v311 = vadd.f32 %v309, %v310
        %v312 = vrot.slane %v311, 2
        %v313 = vadd.f32 %v311, %v312
        %v314 = vrot.slane %v313, 1
        %v315 = vadd.f32 %v313, %v314
        %316 = vst [vmem:[%s244] sm:$0x1] %v315
        %v317 = vld [vmem:[#allocation3] sm:$0xff]
        %v318 = vrot.slane %v317, 4
        %v319 = vadd.f32 %v317, %v318
        %v320 = vrot.slane %v319, 2
        %v321 = vadd.f32 %v319, %v320
        %v322 = vrot.slane %v321, 1
        %v323 = vadd.f32 %v321, %v322
        %324 = vst [vmem:[%s247] sm:$0x1] %v323
      $region36: #{cls_pos_loss.1} parent=27 // pred_fallthru
        _
      %p325 = scmp.lt.s32.totalorder %s20, 0
      %s326 = scalar_select %p325, %s20, 0
      %s327 = scalar_lea.vmem %s2, %s326
      %p328 = scmp.lt.s32.totalorder %s20, 0
      %s329 = scalar_select %p328, %s20, 0
      %s330 = scalar_lea.vmem %s3, %s329
      // Predicated region
      $region37: #{cls_pos_loss.1} parent=27 // pred_check
        %p331 = pneg %p112
      $region38: #{cls_pos_loss.1} parent=27 // pred_check_branch
        %333 = sbr.rel (%p331) target = $region40
      $region39: #{cls_pos_loss.1} parent=27 // pred_region
        _
      $region40: #{cls_pos_loss.1} parent=27 // pred_fallthru
        _
      // Predicated region
      $region41: #{cls_pos_loss.1} parent=27 // pred_check
        %p334 = pneg %p138
      $region42: #{cls_pos_loss.1} parent=27 // pred_check_branch
        %336 = sbr.rel (%p334) target = $region44
      $region43: #{cls_pos_loss.1} parent=27 // pred_region
        _
      $region44: #{cls_pos_loss.1} parent=27 // pred_fallthru
        _
      // Predicated region
      $region45: #{cls_pos_loss.1} parent=27 // pred_check
        %p337 = pneg %p112
      $region46: #{cls_pos_loss.1} parent=27 // pred_check_branch
        %339 = sbr.rel (%p337) target = $region48
      $region47: #{cls_pos_loss.1} parent=27 // pred_region
        %p340 = scmp.lt.s32.totalorder %s20, 0
        %s341 = scalar_select %p340, %s20, 0
        %s342 = scalar_lea.vmem %s2, %s341
      $region48: #{cls_pos_loss.1} parent=27 // pred_fallthru
        _
      // Predicated region
      $region49: #{cls_pos_loss.1} parent=27 // pred_check
        %p343 = pneg %p138
      $region50: #{cls_pos_loss.1} parent=27 // pred_check_branch
        %345 = sbr.rel (%p343) target = $region52
      $region51: #{cls_pos_loss.1} parent=27 // pred_region
        %p346 = scmp.lt.s32.totalorder %s20, 0
        %s347 = scalar_select %p346, %s20, 0
        %s348 = scalar_lea.vmem %s3, %s347
      $region52: #{cls_pos_loss.1} parent=27 // pred_fallthru
        _
    $region28: #{cls_pos_loss.1} parent=5 // pred_fallthru
      _
    %p349 = scmp.le.s32.totalorder 2, %s10
    // Predicated region
    $region53: #{cls_pos_loss.1} parent=5 // pred_check
      %p350 = pneg %p349
    $region54: #{cls_pos_loss.1} parent=5 // pred_check_branch
      %352 = sbr.rel (%p350) target = $region56
    $region55: #{cls_pos_loss.1} parent=5 // pred_region
      %s353 = ssub.s32 %s10, 2
    $region56: #{cls_pos_loss.1} parent=5 // pred_fallthru
      _
  $region6: #{cls_pos_loss.1} parent=0 // loop_footer
    %s14 = sadd.s32 1, %s10
  $region7: #{cls_pos_loss.1} parent=0 // loop_footer_branch
    %9 = sbr.rel target = $region3
  $region8: #{cls_pos_loss.1} parent=0 // loop_exit
    _

</llo_original>
